<compile_context>
chip_gen: v6e
topology: v6e:2x2x1
jax: 0.10.0
libtpu: 0.0.40
codegen_flags: <defaults>
</compile_context>

<pallas_src>
import functools

import jax
import jax.numpy as jnp
from jax.experimental import pallas as pl
from jax.experimental.pallas import tpu as pltpu


def _round_up(v, m):
    return -(-v // m) * m


def tce_kernel(x_ref, t_ref, loss_ref, m_sc, s_sc, p_sc, *, tile_h, h_rem, mask_tail):
    """One (tile_n, tile_h) logits block; online logsumexp across the H grid axis."""
    j = pl.program_id(1)
    last = pl.num_programs(1) - 1

    @pl.when(j == 0)
    def _init():
        m_sc[...] = jnp.full(m_sc.shape, -jnp.inf, jnp.float32)
        s_sc[...] = jnp.zeros(s_sc.shape, jnp.float32)
        p_sc[...] = jnp.zeros(p_sc.shape, jnp.float32)

    def _accumulate(mask_cols):
        x = x_ref[...]                                   # raw dtype (tile_n, tile_h)
        t = t_ref[...]                                   # (tile_n, 1) int32
        col = jax.lax.broadcasted_iota(jnp.int32, x.shape, 1)
        if mask_cols:
            # Ragged-H tail: pad columns -> -inf so exp underflows to exactly 0.
            # (Only traced into the j == last branch, so full tiles pay nothing.)
            x = jnp.where(col < h_rem, x, jnp.asarray(-jnp.inf, dtype=x.dtype))

        # Gather x[n, t[n]] for the classes covered by this H tile. The compare is
        # against a j-independent iota; t_local is a cheap (tile_n, 1) column op.
        # The single-match row sum in the input dtype is exact.
        t_local = t - j * tile_h
        p_sc[...] += jnp.sum(
            jnp.where(col == t_local, x, jnp.zeros((), dtype=x.dtype)),
            axis=-1, keepdims=True).astype(jnp.float32)

        # Online (running) logsumexp. max stays in the input dtype (exact); the
        # exp path promotes via broadcasting (bf16 - f32 -> f32), so there is no
        # multi-consumer full-block f32 copy held live in VMEM.
        m_prev = m_sc[...]
        m_new = jnp.maximum(
            m_prev, jnp.max(x, axis=-1, keepdims=True).astype(jnp.float32))
        s_sc[...] = s_sc[...] * jnp.exp(m_prev - m_new) + jnp.sum(
            jnp.exp(x - m_new), axis=-1, keepdims=True)
        m_sc[...] = m_new

    if mask_tail:
        @pl.when(j < last)
        def _full_tiles():
            _accumulate(False)

        @pl.when(j == last)
        def _tail_tile():
            _accumulate(True)
    else:
        _accumulate(False)

    @pl.when(j == last)
    def _finalize():
        t = t_ref[...]
        loss = m_sc[...] + jnp.log(s_sc[...]) - p_sc[...]
        # ignore_index semantics: negative targets (e.g. -100) contribute loss 0.
        loss_ref[...] = jnp.where(t >= 0, loss, 0.0)


def _vmem_capacity_bytes():
    try:
        return int(pltpu.get_tpu_info().vmem_capacity_bytes)
    except Exception:
        return 64 * 1024 * 1024        # conservative default (v7x per-TC VMEM)


def _pick_tile_h(H, tile_n, itemsize, max_tile_h):
    """Choose the H tile: budget ~40% of VMEM for 2x input buffers + f32 exp temps."""
    if max_tile_h is None:
        cap = _vmem_capacity_bytes()
        budget = (2 * cap) // 5
        per_elem = 2 * itemsize + 8      # double-buffered input + ~2 f32 temps
        max_tile_h = max(128, budget // (tile_n * per_elem))
    max_tile_h = max(128, (max_tile_h // 128) * 128)
    if H <= max_tile_h:
        return H, False                  # single full-H block, no masking
    # Prefer a 128-aligned divisor of H under the budget -> no ragged tail/mask.
    if H % 128 == 0:
        q = H // 128
        best = 0
        for k in range(1, q + 1):
            if q % k == 0 and k * 128 <= max_tile_h:
                best = k * 128
        if best:
            return best, False
    return max_tile_h, True


def tce_loss(logits, truths, *, tile_n=None, max_tile_h=None):
    """logits: (B, T, H) float, truths: (B, T) int -> per-token loss (B*T,) f32."""
    B, T, H = logits.shape
    N = B * T

    x = logits.reshape(N, H)                  # contiguous reshape, no copy
    t = truths.reshape(N, 1).astype(jnp.int32)

    itemsize = jnp.dtype(x.dtype).itemsize
    min_rows = {2: 16, 1: 32}.get(itemsize, 8)    # sublane packing minimum
    if tile_n is None:
        tile_n = 256
        if N < 2 * tile_n:
            # Keep >= 2 row tiles so both v7x TensorCores get work on the
            # "parallel" rows axis (costs nothing on single-TC v5e/v6e).
            tile_n = max(min_rows, _round_up(pl.cdiv(N, 2), min_rows))
    assert tile_n % min_rows == 0, f"tile_n must be a multiple of {min_rows}"

    tile_h, mask_tail = _pick_tile_h(H, tile_n, itemsize, max_tile_h)
    n_row_tiles = pl.cdiv(N, tile_n)
    n_h_tiles = pl.cdiv(H, tile_h)
    h_rem = H - (n_h_tiles - 1) * tile_h

    # VMEM limit derived from the real block sizes (+ headroom), capped at 3/4 of
    # physical VMEM so the same code is safe on 64 MiB (v7x) and 128 MiB parts.
    cap = _vmem_capacity_bytes()
    working = (2 * tile_n * tile_h * itemsize      # double-buffered logits block
               + 2 * tile_n * tile_h * 4           # f32 exp-path temps
               + 8 * tile_n * 4)                   # columns + scratch
    vmem_limit = int(min(cap * 3 // 4, max(working + (4 << 20), 32 << 20)))

    kernel = functools.partial(
        tce_kernel, tile_h=tile_h, h_rem=h_rem, mask_tail=mask_tail)

    out = pl.pallas_call(
        kernel,
        out_shape=jax.ShapeDtypeStruct((N, 1), jnp.float32),
        grid_spec=pltpu.PrefetchScalarGridSpec(
            num_scalar_prefetch=0,
            grid=(n_row_tiles, n_h_tiles),
            in_specs=[
                pl.BlockSpec((tile_n, tile_h), lambda i, j: (i, j)),
                pl.BlockSpec((tile_n, 1), lambda i, j: (i, 0)),
            ],
            out_specs=pl.BlockSpec((tile_n, 1), lambda i, j: (i, 0)),
            scratch_shapes=[
                pltpu.VMEM((tile_n, 1), jnp.float32),   # running max
                pltpu.VMEM((tile_n, 1), jnp.float32),   # running sum(exp)
                pltpu.VMEM((tile_n, 1), jnp.float32),   # picked target logit
            ],
        ),
        compiler_params=pltpu.CompilerParams(
            dimension_semantics=("parallel", "arbitrary"),
            vmem_limit_bytes=vmem_limit,
        ),
        cost_estimate=pl.CostEstimate(
            flops=5 * N * H,
            transcendentals=N * H,
            bytes_accessed=N * H * itemsize + N * 8,
        ),
    )(x, t)
    return out[:, 0]


def tce_loss_ref(logits, truths):
    B, T, H = logits.shape
    x = logits.reshape(B * T, H).astype(jnp.float32)
    t = truths.reshape(-1).astype(jnp.int32)
    lse = jax.nn.logsumexp(x, axis=-1)
    picked = jnp.take_along_axis(x, jnp.maximum(t, 0)[:, None], axis=-1)[:, 0]
    return jnp.where(t >= 0, lse - picked, 0.0)


if __name__ == "__main__":
    key = jax.random.PRNGKey(0)
    k1, k2, k3, k4 = jax.random.split(key, 4)

    # Case 1: shapes implied by the module's (B, T, H) logits + (B, T) targets.
    B, T, H = 2, 8, 32
    logits = jax.random.normal(k1, (B, T, H), dtype=jnp.float32)
    truths = jax.random.randint(k2, (B, T), 0, H, dtype=jnp.int32)
    loss = tce_loss(logits, truths)
    jax.block_until_ready(loss)
    ref = tce_loss_ref(logits, truths)
    assert loss.shape == (B * T,)
    assert jnp.allclose(loss, ref, atol=1e-5, rtol=1e-5), "case 1 mismatch"

    # Case 2: bf16 logits, ragged N (192 rows, 128-row tiles), ragged H
    # (320 classes, 128-wide tiles -> in-kernel tail mask + online logsumexp),
    # and a -100 (ignored) target, with small forced tiles to hit those paths.
    B2, T2, H2 = 2, 96, 320
    logits2 = jax.random.normal(k3, (B2, T2, H2), dtype=jnp.bfloat16)
    truths2 = jax.random.randint(k4, (B2, T2), 0, H2, dtype=jnp.int32)
    truths2 = truths2.at[0, 3].set(-100)
    loss2 = tce_loss(logits2, truths2, tile_n=128, max_tile_h=128)
    jax.block_until_ready(loss2)
    ref2 = tce_loss_ref(logits2, truths2)
    assert jnp.allclose(loss2, ref2, atol=1e-4, rtol=1e-4), "case 2 mismatch"

    print("KERNEL_OK")
</pallas_src>

<mosaic_0001>
module attributes {stable_mosaic.version = 11 : i64} {
  func.func @tce_kernel(%arg0: i32, %arg1: i32, %arg2: memref<8x32xf32, #tpu.memory_space<vmem>>, %arg3: memref<8x1xi32, #tpu.memory_space<vmem>>, %arg4: memref<8x1xf32, #tpu.memory_space<vmem>>, %arg5: memref<8x1xf32, #tpu.memory_space<vmem>>, %arg6: memref<8x1xf32, #tpu.memory_space<vmem>>, %arg7: memref<8x1xf32, #tpu.memory_space<vmem>>) attributes {dimension_semantics = [#tpu.dimension_semantics<parallel>, #tpu.dimension_semantics<arbitrary>], iteration_bounds = array<i64: 2, 1>, scalar_prefetch = 0 : i64, scratch_operands = 3 : i64, tpu.core_type = #tpu.core_type<tc>, window_params = [{transform_indices = @transform_0, window_bounds = array<i64: 8, 32>}, {transform_indices = @transform_1, window_bounds = array<i64: 8, 1>}, {transform_indices = @transform_2, window_bounds = array<i64: 8, 1>}]} {
    %c0_i32 = arith.constant 0 : i32
    %0 = arith.cmpi eq, %arg1, %c0_i32 : i32
    %1 = arith.extui %0 : i1 to i32
    %c0_i32_0 = arith.constant 0 : i32
    %2 = arith.cmpi ne, %1, %c0_i32_0 : i32
    scf.if %2 {
      %cst_21 = arith.constant 0xFF800000 : f32
      %37 = vector.broadcast %cst_21 : f32 to vector<8x1xf32>
      %c0_22 = arith.constant 0 : index
      %c0_23 = arith.constant 0 : index
      %38 = vector.load %arg5[%c0_22, %c0_23] : memref<8x1xf32, #tpu.memory_space<vmem>>, vector<8x1xf32>
      tpu.vector_store %arg5[%c0_22, %c0_23], %37 {strides = array<i32>} : memref<8x1xf32, #tpu.memory_space<vmem>>, vector<8x1xf32>,
      %cst_24 = arith.constant 0.000000e+00 : f32
      %39 = vector.broadcast %cst_24 : f32 to vector<8x1xf32>
      %c0_25 = arith.constant 0 : index
      %c0_26 = arith.constant 0 : index
      %40 = vector.load %arg6[%c0_25, %c0_26] : memref<8x1xf32, #tpu.memory_space<vmem>>, vector<8x1xf32>
      tpu.vector_store %arg6[%c0_25, %c0_26], %39 {strides = array<i32>} : memref<8x1xf32, #tpu.memory_space<vmem>>, vector<8x1xf32>,
      %cst_27 = arith.constant 0.000000e+00 : f32
      %41 = vector.broadcast %cst_27 : f32 to vector<8x1xf32>
      %c0_28 = arith.constant 0 : index
      %c0_29 = arith.constant 0 : index
      %42 = vector.load %arg7[%c0_28, %c0_29] : memref<8x1xf32, #tpu.memory_space<vmem>>, vector<8x1xf32>
      tpu.vector_store %arg7[%c0_28, %c0_29], %41 {strides = array<i32>} : memref<8x1xf32, #tpu.memory_space<vmem>>, vector<8x1xf32>,
    } else {
    }
    %c0 = arith.constant 0 : index
    %c0_1 = arith.constant 0 : index
    %3 = vector.load %arg2[%c0, %c0_1] : memref<8x32xf32, #tpu.memory_space<vmem>>, vector<8x32xf32>
    %c0_2 = arith.constant 0 : index
    %c0_3 = arith.constant 0 : index
    %4 = vector.load %arg3[%c0_2, %c0_3] : memref<8x1xi32, #tpu.memory_space<vmem>>, vector<8x1xi32>
    %5 = tpu.iota {dimensions = array<i32: 1>} : vector<8x32xi32>
    %c32_i32 = arith.constant 32 : i32
    %6 = arith.muli %arg1, %c32_i32 : i32
    %7 = vector.broadcast %6 : i32 to vector<8x1xi32>
    %8 = arith.subi %4, %7 : vector<8x1xi32>
    %c0_4 = arith.constant 0 : index
    %c0_5 = arith.constant 0 : index
    %9 = vector.load %arg7[%c0_4, %c0_5] : memref<8x1xf32, #tpu.memory_space<vmem>>, vector<8x1xf32>
    %10 = vector.broadcast %8 : vector<8x1xi32> to vector<8x32xi32>
    %11 = arith.cmpi eq, %5, %10 : vector<8x32xi32>
    %cst = arith.constant 0.000000e+00 : f32
    %12 = vector.broadcast %cst : f32 to vector<8x32xf32>
    %13 = arith.select %11, %3, %12 : vector<8x32xi1>, vector<8x32xf32>
    %cst_6 = arith.constant dense<0.000000e+00> : vector<8xf32>
    %14 = vector.multi_reduction <add>, %13, %cst_6 [1] : vector<8x32xf32> to vector<8xf32>
    %15 = vector.shape_cast %14 : vector<8xf32> to vector<8x1xf32>
    %16 = arith.addf %9, %15 : vector<8x1xf32>
    %c0_7 = arith.constant 0 : index
    %c0_8 = arith.constant 0 : index
    %17 = vector.load %arg7[%c0_7, %c0_8] : memref<8x1xf32, #tpu.memory_space<vmem>>, vector<8x1xf32>
    tpu.vector_store %arg7[%c0_7, %c0_8], %16 {strides = array<i32>} : memref<8x1xf32, #tpu.memory_space<vmem>>, vector<8x1xf32>,
    %c0_9 = arith.constant 0 : index
    %c0_10 = arith.constant 0 : index
    %18 = vector.load %arg5[%c0_9, %c0_10] : memref<8x1xf32, #tpu.memory_space<vmem>>, vector<8x1xf32>
    %cst_11 = arith.constant dense<0xFF800000> : vector<8xf32>
    %19 = vector.multi_reduction <maximumf>, %3, %cst_11 [1] : vector<8x32xf32> to vector<8xf32>
    %20 = vector.shape_cast %19 : vector<8xf32> to vector<8x1xf32>
    %21 = arith.maximumf %18, %20 : vector<8x1xf32>
    %c0_12 = arith.constant 0 : index
    %c0_13 = arith.constant 0 : index
    %22 = vector.load %arg6[%c0_12, %c0_13] : memref<8x1xf32, #tpu.memory_space<vmem>>, vector<8x1xf32>
    %23 = arith.subf %18, %21 : vector<8x1xf32>
    %24 = math.exp %23 : vector<8x1xf32>
    %25 = arith.mulf %22, %24 : vector<8x1xf32>
    %26 = vector.broadcast %21 : vector<8x1xf32> to vector<8x32xf32>
    %27 = arith.subf %3, %26 : vector<8x32xf32>
    %28 = math.exp %27 : vector<8x32xf32>
    %cst_14 = arith.constant dense<0.000000e+00> : vector<8xf32>
    %29 = vector.multi_reduction <add>, %28, %cst_14 [1] : vector<8x32xf32> to vector<8xf32>
    %30 = vector.shape_cast %29 : vector<8xf32> to vector<8x1xf32>
    %31 = arith.addf %25, %30 : vector<8x1xf32>
    %c0_15 = arith.constant 0 : index
    %c0_16 = arith.constant 0 : index
    %32 = vector.load %arg6[%c0_15, %c0_16] : memref<8x1xf32, #tpu.memory_space<vmem>>, vector<8x1xf32>
    tpu.vector_store %arg6[%c0_15, %c0_16], %31 {strides = array<i32>} : memref<8x1xf32, #tpu.memory_space<vmem>>, vector<8x1xf32>,
    %c0_17 = arith.constant 0 : index
    %c0_18 = arith.constant 0 : index
    %33 = vector.load %arg5[%c0_17, %c0_18] : memref<8x1xf32, #tpu.memory_space<vmem>>, vector<8x1xf32>
    tpu.vector_store %arg5[%c0_17, %c0_18], %21 {strides = array<i32>} : memref<8x1xf32, #tpu.memory_space<vmem>>, vector<8x1xf32>,
    %c0_i32_19 = arith.constant 0 : i32
    %34 = arith.cmpi eq, %arg1, %c0_i32_19 : i32
    %35 = arith.extui %34 : i1 to i32
    %c0_i32_20 = arith.constant 0 : i32
    %36 = arith.cmpi ne, %35, %c0_i32_20 : i32
    scf.if %36 {
      %c0_21 = arith.constant 0 : index
      %c0_22 = arith.constant 0 : index
      %37 = vector.load %arg3[%c0_21, %c0_22] : memref<8x1xi32, #tpu.memory_space<vmem>>, vector<8x1xi32>
      %c0_23 = arith.constant 0 : index
      %c0_24 = arith.constant 0 : index
      %38 = vector.load %arg5[%c0_23, %c0_24] : memref<8x1xf32, #tpu.memory_space<vmem>>, vector<8x1xf32>
      %c0_25 = arith.constant 0 : index
      %c0_26 = arith.constant 0 : index
      %39 = vector.load %arg6[%c0_25, %c0_26] : memref<8x1xf32, #tpu.memory_space<vmem>>, vector<8x1xf32>
      %40 = math.log %39 : vector<8x1xf32>
      %41 = arith.addf %38, %40 : vector<8x1xf32>
      %c0_27 = arith.constant 0 : index
      %c0_28 = arith.constant 0 : index
      %42 = vector.load %arg7[%c0_27, %c0_28] : memref<8x1xf32, #tpu.memory_space<vmem>>, vector<8x1xf32>
      %43 = arith.subf %41, %42 : vector<8x1xf32>
      %c0_i32_29 = arith.constant 0 : i32
      %44 = vector.broadcast %c0_i32_29 : i32 to vector<8x1xi32>
      %45 = arith.cmpi sge, %37, %44 : vector<8x1xi32>
      %cst_30 = arith.constant 0.000000e+00 : f32
      %46 = vector.broadcast %cst_30 : f32 to vector<8x1xf32>
      %47 = arith.select %45, %43, %46 : vector<8x1xi1>, vector<8x1xf32>
      %c0_31 = arith.constant 0 : index
      %c0_32 = arith.constant 0 : index
      %48 = vector.load %arg4[%c0_31, %c0_32] : memref<8x1xf32, #tpu.memory_space<vmem>>, vector<8x1xf32>
      tpu.vector_store %arg4[%c0_31, %c0_32], %47 {strides = array<i32>} : memref<8x1xf32, #tpu.memory_space<vmem>>, vector<8x1xf32>,
    } else {
    }
    return
  }
  func.func @transform_0(%arg0: i32, %arg1: i32) -> (i32, i32) {
    %c0_i32 = arith.constant 0 : i32
    return %arg0, %arg1 : i32, i32
  }
  func.func @transform_1(%arg0: i32, %arg1: i32) -> (i32, i32) {
    %c0_i32 = arith.constant 0 : i32
    %c0_i32_0 = arith.constant 0 : i32
    return %arg0, %c0_i32 : i32, i32
  }
  func.func @transform_2(%arg0: i32, %arg1: i32) -> (i32, i32) {
    %c0_i32 = arith.constant 0 : i32
    %c0_i32_0 = arith.constant 0 : i32
    return %arg0, %c0_i32 : i32, i32
  }
}

</mosaic_0001>

<llo_original>
// kernel: tpu_custom_call.1
$region0: #{tpu_custom_call.1}
  #allocation0 [shape = 'u32[]', space=smem, size = 0x4, offset = 0x4, fixed_abs, tag = 'smem constant byte address 0x4 - core index']
  #allocation1 [shape = 'u32[144,128]{1,0:T(1,128)}', space=vmem, size = 0x12000, scoped, tag = 'internal scratch']
  #allocation2 [shape = 'f32[8,1]{1,0:T(8,128)}', space=vmem, size = 0x1000, scoped, tag = 'scratch operand']
  #allocation3 [shape = 'f32[8,1]{1,0:T(8,128)}', space=vmem, size = 0x1000, scoped, tag = 'scratch operand']
  #allocation4 [shape = 'f32[8,1]{1,0:T(8,128)}', space=vmem, size = 0x1000, scoped, tag = 'scratch operand']
  %s0 = inlined_call_operand.vmem [shape: f32[16,32], index: 0, kind: input, shape index: {}]
  %s1 = inlined_call_operand.vmem [shape: s32[16,1], index: 1, kind: input, shape index: {}]
  %s2 = inlined_call_operand.vmem [shape: f32[16,1], index: 2, kind: output, shape index: {}]
  %s3 = sld [smem:[#allocation0]]
  $region49: #{tpu_custom_call.1} parent=0
    _
  %s5 = ssub.s32 1, %s3
  %s6 = scalar_select 0, %s5, %s3
  loop: start=0, step=1, limit=4
  $region2: #{tpu_custom_call.1} parent=0 // loop_pre_header
    _
  $region3: #{tpu_custom_call.1} parent=0 // loop_header
    %s8 = sphi 0, %s12
    %p9 = scmp.ge.s32.totalorder %s8, 4
    %s15 = sphi 0, %s27
    %s16 = sphi 0, %s23
    %s17 = sphi 0, %s15
    %s18 = sphi 0, %s16
    %s19 = sphi 0, %s17
    %s20 = sphi 0, %s18
    %s32 = sphi 0, %s34
    %s35 = sphi 0, %s32
    %s36 = sphi 0, %s35
    %s52 = sphi 0, %s36
    %s58 = sphi 0, %s60
    %s61 = sphi 0, %s58
    %s62 = sphi 0, %s61
    %s78 = sphi 0, %s62
    %s84 = sphi 0, %s86
    %s87 = sphi 0, %s84
    %s88 = sphi 0, %s87
    %s104 = sphi 0, %s88
  $region4: #{tpu_custom_call.1} parent=0 // loop_header_branch
    %11 = sbr.rel (%p9) target = $region8
  $region5: #{tpu_custom_call.1} parent=0 // loop_body
    %s13 = ssub.s32 %s8, 1
    %s14 = ssub.s32 %s8, 2
    %s21 = sadd.s32 1, %s16
    %p22 = scmp.ge.s32.totalorder %s21, 1
    %s23 = scalar_select %p22, 0, %s21
    %s24 = sadd.s32 1, %s15
    %s25 = scalar_select %p22, %s24, %s15
    %p26 = scmp.ge.s32.totalorder %s25, 2
    %s27 = scalar_select %p26, 0, %s25
    %s28 = ssub.s32 %s15, %s27
    %s29 = ssub.s32 %s16, %s23
    %s30 = sor.u32 %s28, %s29
    %p31 = scmp.eq.s32.totalorder %s30, 0
    %s33 = sadd.s32 %s32, 1
    %s34 = scalar_select %p31, %s32, %s33
    %p37 = pneg %p31
    %p38 = scmp.eq.s32.totalorder %s8, 1
    %p39 = por %p37, %p38
    %p40 = scmp.ne.s32.totalorder %s32, %s35
    %p41 = scmp.eq.s32.totalorder %s8, 0
    %p42 = por %p40, %p41
    %p43 = scmp.ne.s32.totalorder %s32, %s35
    %p44 = scmp.eq.s32.totalorder %s13, 1
    %p45 = por %p43, %p44
    %p46 = scmp.ne.s32.totalorder %s35, %s36
    %p47 = scmp.eq.s32.totalorder %s13, 0
    %p48 = por %p46, %p47
    %p49 = scmp.ne.s32.totalorder %s35, %s36
    %p50 = scmp.eq.s32.totalorder %s14, 1
    %p51 = por %p49, %p50
    %p53 = scmp.ne.s32.totalorder %s36, %s52
    %p54 = scmp.eq.s32.totalorder %s14, 0
    %p55 = por %p53, %p54
    %s56 = ssub.s32 %s15, %s27
    %p57 = scmp.eq.s32.totalorder %s56, 0
    %s59 = sadd.s32 %s58, 1
    %s60 = scalar_select %p57, %s58, %s59
    %p63 = pneg %p57
    %p64 = scmp.eq.s32.totalorder %s8, 1
    %p65 = por %p63, %p64
    %p66 = scmp.ne.s32.totalorder %s58, %s61
    %p67 = scmp.eq.s32.totalorder %s8, 0
    %p68 = por %p66, %p67
    %p69 = scmp.ne.s32.totalorder %s58, %s61
    %p70 = scmp.eq.s32.totalorder %s13, 1
    %p71 = por %p69, %p70
    %p72 = scmp.ne.s32.totalorder %s61, %s62
    %p73 = scmp.eq.s32.totalorder %s13, 0
    %p74 = por %p72, %p73
    %p75 = scmp.ne.s32.totalorder %s61, %s62
    %p76 = scmp.eq.s32.totalorder %s14, 1
    %p77 = por %p75, %p76
    %p79 = scmp.ne.s32.totalorder %s62, %s78
    %p80 = scmp.eq.s32.totalorder %s14, 0
    %p81 = por %p79, %p80
    %s82 = ssub.s32 %s15, %s27
    %p83 = scmp.eq.s32.totalorder %s82, 0
    %s85 = sadd.s32 %s84, 1
    %s86 = scalar_select %p83, %s84, %s85
    %p89 = pneg %p83
    %p90 = scmp.eq.s32.totalorder %s8, 1
    %p91 = por %p89, %p90
    %p92 = scmp.ne.s32.totalorder %s84, %s87
    %p93 = scmp.eq.s32.totalorder %s8, 0
    %p94 = por %p92, %p93
    %p95 = scmp.ne.s32.totalorder %s84, %s87
    %p96 = scmp.eq.s32.totalorder %s13, 1
    %p97 = por %p95, %p96
    %p98 = scmp.ne.s32.totalorder %s87, %s88
    %p99 = scmp.eq.s32.totalorder %s13, 0
    %p100 = por %p98, %p99
    %p101 = scmp.ne.s32.totalorder %s87, %s88
    %p102 = scmp.eq.s32.totalorder %s14, 1
    %p103 = por %p101, %p102
    %p105 = scmp.ne.s32.totalorder %s88, %s104
    %p106 = scmp.eq.s32.totalorder %s14, 0
    %p107 = por %p105, %p106
    %p108 = scmp.le.s32.totalorder 1, %s8
    %p109 = scmp.lt.s32.totalorder %s8, 3
    %p110 = pnand %p108, %p109
    %p111 = pneg %p110
    // Predicated region
    $region9: #{tpu_custom_call.1} parent=5 // pred_check
      _
    $region10: #{tpu_custom_call.1} parent=5 // pred_check_branch
      %113 = sbr.rel (%p110) target = $region12
    $region11: #{tpu_custom_call.1} parent=5 // pred_region
      %s114 = ssub.s32 %s8, 1
    $region12: #{tpu_custom_call.1} parent=5 // pred_fallthru
      _
    %p115 = scmp.lt.s32.totalorder %s8, 2
    // Predicated region
    $region13: #{tpu_custom_call.1} parent=5 // pred_check
      %p116 = pneg %p115
    $region14: #{tpu_custom_call.1} parent=5 // pred_check_branch
      %118 = sbr.rel (%p116) target = $region16
    $region15: #{tpu_custom_call.1} parent=5 // pred_region
      // Predicated region
      $region17: #{tpu_custom_call.1} parent=15 // pred_check
        %p119 = pneg %p42
      $region18: #{tpu_custom_call.1} parent=15 // pred_check_branch
        %121 = sbr.rel (%p119) target = $region20
      $region19: #{tpu_custom_call.1} parent=15 // pred_region
        %p122 = scmp.lt.s32.totalorder %s15, 1
        %s123 = scalar_select %p122, %s15, 1
        %p124 = scmp.lt.s32.totalorder %s16, 0
        %s125 = scalar_select %p124, %s16, 0
        %s126 = sadd.s32 %s125, %s123
        %s127 = smul.addr %s126, 8
        %s128 = scalar_lea.vmem %s0, %s127
      $region20: #{tpu_custom_call.1} parent=15 // pred_fallthru
        _
      // Predicated region
      $region21: #{tpu_custom_call.1} parent=15 // pred_check
        %p129 = pneg %p68
      $region22: #{tpu_custom_call.1} parent=15 // pred_check_branch
        %131 = sbr.rel (%p129) target = $region24
      $region23: #{tpu_custom_call.1} parent=15 // pred_region
        %p132 = scmp.lt.s32.totalorder %s15, 1
        %s133 = scalar_select %p132, %s15, 1
        %s134 = smul.addr %s133, 8
        %s135 = scalar_lea.vmem %s1, %s134
      $region24: #{tpu_custom_call.1} parent=15 // pred_fallthru
        _
    $region16: #{tpu_custom_call.1} parent=5 // pred_fallthru
      _
    %p136 = scmp.le.s32.totalorder 1, %s8
    %p137 = scmp.lt.s32.totalorder %s8, 3
    %p138 = pnand %p136, %p137
    %p139 = pneg %p138
    // Predicated region
    $region25: #{tpu_custom_call.1} parent=5 // pred_check
      _
    $region26: #{tpu_custom_call.1} parent=5 // pred_check_branch
      %141 = sbr.rel (%p138) target = $region28
    $region27: #{tpu_custom_call.1} parent=5 // pred_region
      %s142 = ssub.s32 %s8, 1
      %p143 = scmp.lt.s32.totalorder %s17, 1
      %s144 = scalar_select %p143, %s17, 1
      %p145 = scmp.lt.s32.totalorder %s18, 0
      %s146 = scalar_select %p145, %s18, 0
      %s147 = sadd.s32 %s146, %s144
      %s148 = smul.addr %s147, 8
      %s149 = scalar_lea.vmem %s0, %s148
      %p150 = pneg %p48
      %p151 = pneg %p45
      %p152 = scmp.lt.s32.totalorder %s17, 1
      %s153 = scalar_select %p152, %s17, 1
      %s154 = smul.addr %s153, 8
      %s155 = scalar_lea.vmem %s1, %s154
      %p156 = pneg %p74
      %p157 = pneg %p71
      %p158 = pneg %p100
      %p159 = pneg %p97
      %p160 = scmp.lt.s32.totalorder %s17, 1
      %s161 = scalar_select %p160, %s17, 1
      %s162 = smul.addr %s161, 8
      %s163 = scalar_lea.vmem %s2, %s162
      %p164 = scmp.lt.s32.totalorder %s17, 1
      %s165 = scalar_select %p164, %s17, 1
      %p166 = scmp.lt.s32.totalorder %s18, 0
      %s167 = scalar_select %p166, %s18, 0
      %s168 = sadd.s32 %s167, %s165
      %s169 = smul.addr %s168, 8
      %s170 = scalar_lea.vmem %s0, %s169
      %p171 = scmp.lt.s32.totalorder %s17, 1
      %s172 = scalar_select %p171, %s17, 1
      %s173 = smul.addr %s172, 8
      %s174 = scalar_lea.vmem %s1, %s173
      %p175 = scmp.lt.s32.totalorder %s17, 1
      %s176 = scalar_select %p175, %s17, 1
      %s177 = smul.addr %s176, 8
      %s178 = scalar_lea.vmem %s2, %s177
      %p179 = scmp.eq.s32.totalorder %s18, 0
      // Predicated region
      $region29: #{tpu_custom_call.1} parent=27 // pred_check
        %p180 = pneg %p179
      $region30: #{tpu_custom_call.1} parent=27 // pred_check_branch
        %182 = sbr.rel (%p180) target = $region32
      $region31: #{tpu_custom_call.1} parent=27 // pred_region
        %vm183 = vcmask 7168
        %184 = vst.msk [vmem:[#allocation2] sm:$0xff] %vm183, -inf
        %185 = vst.msk [vmem:[#allocation3] sm:$0xff] %vm183, 0.0
        %186 = vst.msk [vmem:[#allocation4] sm:$0xff] %vm183, 0.0
      $region32: #{tpu_custom_call.1} parent=27 // pred_fallthru
        _
      %v187 = vld [vmem:[%s170] sm:$0xff]
      %v188 = vld [vmem:[%s174] sm:$0xff]
      %v189 = vlaneseq
      %v190 = vand.u32 %v189, 127
      %s191 = smul.u32 %s18, 32
      %v192 = vstv %s191
      %v193 = vsub.s32 %v188, %v192
      %v194 = vld [vmem:[#allocation4] sm:$0xff]
      %195 = vset.pattern.permute.xlu0 0
      %196 = vperm.xlu0 %195, %v193
      %v197 = vpop.permute.xlu0 %196
      %vm198 = vcmp.eq.s32.totalorder %v190, %v197
      %v199 = vsel %vm198, %v187, 0.0
      %vm200 = vcmask 261120
      %v201 = vsel %vm200, %v199, 0.0
      %202 = vadd.xlane.f32.xlu0 %v201
      %v203 = vpop.xlane.xlu0 %202
      %v204 = vadd.f32 %v194, %v203
      %vm205 = vcmask 7168
      %206 = vst.msk [vmem:[#allocation4] sm:$0xff] %vm205, %v204
      %v207 = vld [vmem:[#allocation2] sm:$0xff]
      %v208 = vsel %vm200, %v187, -inf
      %209 = vmax.xlane.f32.xlu0 %v208
      %v210 = vpop.xlane.xlu0 %209
      %v211 = vmax.f32 %v207, %v210
      %v212 = vld [vmem:[#allocation3] sm:$0xff]
      %v213 = vsub.f32 %v207, %v211
      %v214 = vmul.f32 %v213, 1.442695
      %v215 = vpow.pop %v214
      %v216 = vmul.f32 %v212, %v215
      %218 = vset.pattern.permute.xlu0 0
      %219 = vperm.xlu0 %218, %v211
      %v220 = vpop.permute.xlu0 %219
      %v222 = vsub.f32 %v187, %v220
      %v223 = vmul.f32 %v222, 1.442695
      %v224 = vpow.pop %v223
      %v225 = vsel %vm200, %v224, 0.0
      %226 = vadd.xlane.f32.xlu0 %v225
      %v227 = vpop.xlane.xlu0 %226
      %v228 = vadd.f32 %v216, %v227
      %229 = vst.msk [vmem:[#allocation3] sm:$0xff] %vm205, %v228
      %230 = vst.msk [vmem:[#allocation2] sm:$0xff] %vm205, %v211
      // Predicated region
      $region33: #{tpu_custom_call.1} parent=27 // pred_check
        %p231 = pneg %p179
      $region34: #{tpu_custom_call.1} parent=27 // pred_check_branch
        %233 = sbr.rel (%p231) target = $region36
      $region35: #{tpu_custom_call.1} parent=27 // pred_region
        %v234 = vld [vmem:[%s174] sm:$0xff]
        %v235 = vld [vmem:[#allocation2] sm:$0xff]
        %v236 = vld [vmem:[#allocation3] sm:$0xff]
        %v237 = vlog2.pop %v236
        %v238 = vmul.f32 %v237, 0.6931472
        %v239 = vadd.f32 %v235, %v238
        %v240 = vld [vmem:[#allocation4] sm:$0xff]
        %v241 = vsub.f32 %v239, %v240
        %vm242 = vcmp.ge.s32.totalorder %v234, 0
        %v243 = vsel %vm242, %v241, 0.0
        %244 = vst.msk [vmem:[%s178] sm:$0xff] %vm205, %v243
      $region36: #{tpu_custom_call.1} parent=27 // pred_fallthru
        _
      %p245 = scmp.lt.s32.totalorder %s17, 1
      %s246 = scalar_select %p245, %s17, 1
      %s247 = smul.addr %s246, 8
      %s248 = scalar_lea.vmem %s2, %s247
      // Predicated region
      $region37: #{tpu_custom_call.1} parent=27 // pred_check
        %p249 = pneg %p97
      $region38: #{tpu_custom_call.1} parent=27 // pred_check_branch
        %251 = sbr.rel (%p249) target = $region40
      $region39: #{tpu_custom_call.1} parent=27 // pred_region
        _
      $region40: #{tpu_custom_call.1} parent=27 // pred_fallthru
        _
    $region28: #{tpu_custom_call.1} parent=5 // pred_fallthru
      _
    %p252 = scmp.le.s32.totalorder 2, %s8
    // Predicated region
    $region41: #{tpu_custom_call.1} parent=5 // pred_check
      %p253 = pneg %p252
    $region42: #{tpu_custom_call.1} parent=5 // pred_check_branch
      %255 = sbr.rel (%p253) target = $region44
    $region43: #{tpu_custom_call.1} parent=5 // pred_region
      %s256 = ssub.s32 %s8, 2
      // Predicated region
      $region45: #{tpu_custom_call.1} parent=43 // pred_check
        %p257 = pneg %p103
      $region46: #{tpu_custom_call.1} parent=43 // pred_check_branch
        %259 = sbr.rel (%p257) target = $region48
      $region47: #{tpu_custom_call.1} parent=43 // pred_region
        %p260 = scmp.lt.s32.totalorder %s19, 1
        %s261 = scalar_select %p260, %s19, 1
        %s262 = smul.addr %s261, 8
        %s263 = scalar_lea.vmem %s2, %s262
      $region48: #{tpu_custom_call.1} parent=43 // pred_fallthru
        _
    $region44: #{tpu_custom_call.1} parent=5 // pred_fallthru
      _
  $region6: #{tpu_custom_call.1} parent=0 // loop_footer
    %s12 = sadd.s32 1, %s8
  $region7: #{tpu_custom_call.1} parent=0 // loop_footer_branch
    %7 = sbr.rel target = $region3
  $region8: #{tpu_custom_call.1} parent=0 // loop_exit
    _

</llo_original>
